<compile_context>
chip_gen: v7x
topology: tpu7x:2x2x1
jax: 0.10.0
libtpu: 0.0.40
codegen_flags: <defaults>
</compile_context>

<pallas_src>
import functools

import numpy as np
import jax
import jax.numpy as jnp
from jax.experimental import pallas as pl
from jax.experimental.pallas import tpu as pltpu


# ----------------------------------------------------------------------------
# Static buffers (mirrors the PyTorch __init__ relative_position_index build)
# ----------------------------------------------------------------------------
def _build_relative_position_index(window_size):
    Wh, Ww = window_size
    num_relative_distance = (2 * Wh - 1) * (2 * Ww - 1) + 3
    coords = np.stack(np.meshgrid(np.arange(Wh), np.arange(Ww), indexing="ij"))
    coords_flatten = coords.reshape(2, -1)                              # (2, Wh*Ww)
    relative_coords = coords_flatten[:, :, None] - coords_flatten[:, None, :]
    relative_coords = relative_coords.transpose(1, 2, 0).copy()         # (Wh*Ww, Wh*Ww, 2)
    relative_coords[:, :, 0] += Wh - 1
    relative_coords[:, :, 1] += Ww - 1
    relative_coords[:, :, 0] *= 2 * Ww - 1
    N = Wh * Ww + 1
    rpi = np.zeros((N, N), dtype=np.int64)
    rpi[1:, 1:] = relative_coords.sum(-1)
    rpi[0, 0:] = num_relative_distance - 3
    rpi[0:, 0] = num_relative_distance - 2
    rpi[0, 0] = num_relative_distance - 1
    return rpi.astype(np.int32), num_relative_distance


def _build_static_onehot(rpi_np, num_relative_distance):
    """Static (K, M) f32 one-hot of the (static) flattened index."""
    M = rpi_np.size
    onehot = np.zeros((num_relative_distance, M), dtype=np.float32)
    onehot[rpi_np.reshape(-1), np.arange(M)] = 1.0
    return onehot


# ----------------------------------------------------------------------------
# Kernels
# ----------------------------------------------------------------------------
def _relpos_bias_kernel(table_t_ref, onehot_ref, o_ref):
    # table_t: (H, K)  onehot: (K, M) static  ->  out (H, M) lane-dense along M
    # Exact gather (exactly one 1.0 per column), runs ONCE per weight load.
    o_ref[...] = jnp.dot(
        table_t_ref[...], onehot_ref[...], preferred_element_type=jnp.float32
    ).astype(o_ref.dtype)


def _block_kernel(x_ref, ln1w_ref, ln1b_ref, wqkv_ref, bqkv_ref, bias_ref,
                  wproj_ref, bproj_ref, ln2w_ref, ln2b_ref,
                  wfc1_ref, bfc1_ref, wfc2_ref, bfc2_ref, o_ref,
                  *, scale, num_heads):
    """Fused pre-norm ViT block for one batch element: (N, C) -> (N, C)."""
    f32 = jnp.float32
    x = x_ref[...].astype(f32)                    # (N, C)
    N, C = x.shape
    D = C // num_heads

    def ln(z, w, b, eps=1e-5):
        mu = jnp.mean(z, axis=-1, keepdims=True)
        zc = z - mu
        var = jnp.mean(zc * zc, axis=-1, keepdims=True)
        return zc * jax.lax.rsqrt(var + eps) * w + b

    # ---- attention branch:  x + proj(attn(LN1(x))) --------------------------
    xn = ln(x, ln1w_ref[...], ln1b_ref[...])
    qkv = jnp.dot(xn, wqkv_ref[...], preferred_element_type=f32) + bqkv_ref[...]
    bias = bias_ref[...]                          # (H, N, N)
    wproj = wproj_ref[...]                        # (C, C)

    attn_proj = jnp.zeros((N, C), f32)
    for h in range(num_heads):                    # static unroll over heads
        qh = qkv[:, h * D:(h + 1) * D] * scale                    # (N, D)
        kh = qkv[:, C + h * D:C + (h + 1) * D]                    # (N, D)
        vh = qkv[:, 2 * C + h * D:2 * C + (h + 1) * D]            # (N, D)
        s = jax.lax.dot_general(qh, kh, (((1,), (1,)), ((), ())),
                                preferred_element_type=f32) + bias[h]
        m = jnp.max(s, axis=-1, keepdims=True)
        p = jnp.exp(s - m)
        l = jnp.sum(p, axis=-1, keepdims=True)
        # Exact divide keeps bit-tight parity; pl.reciprocal(l, approx=True)
        # is a free-EUP alternative when the VPU slot is the bottleneck.
        p = p / l
        oh = jnp.dot(p, vh, preferred_element_type=f32)           # (N, D)
        # fold the output projection per head -> no (B,H,N,D) transpose ever
        attn_proj = attn_proj + jnp.dot(
            oh, wproj[h * D:(h + 1) * D, :], preferred_element_type=f32)
    x1 = x + attn_proj + bproj_ref[...]

    # ---- MLP branch:  x1 + fc2(gelu(fc1(LN2(x1)))) --------------------------
    x2n = ln(x1, ln2w_ref[...], ln2b_ref[...])
    hdn = jnp.dot(x2n, wfc1_ref[...], preferred_element_type=f32) + bfc1_ref[...]
    hdn = 0.5 * hdn * (1.0 + jnp.tanh(
        0.7978845608028654 * (hdn + 0.044715 * hdn * hdn * hdn)))
    out = x1 + jnp.dot(hdn, wfc2_ref[...], preferred_element_type=f32) + bfc2_ref[...]
    o_ref[...] = out.astype(o_ref.dtype)


# ----------------------------------------------------------------------------
# pallas_call wrappers
# ----------------------------------------------------------------------------
def relpos_bias(table_t, onehot_km):
    """(H, K) @ (K, M) -> (H, M).  Called once at parameter-prep time."""
    H, _ = table_t.shape
    M = onehot_km.shape[1]
    vmem = pl.BlockSpec(memory_space=pltpu.MemorySpace.VMEM)
    return pl.pallas_call(
        _relpos_bias_kernel,
        out_shape=jax.ShapeDtypeStruct((H, M), jnp.float32),
        in_specs=[vmem, vmem],
        out_specs=vmem,
    )(table_t, onehot_km)


def prepare_params(p, onehot_km, num_heads, N):
    """One-time parameter prep: hoists everything off the per-forward path."""
    C = p["w_qkv"].shape[0]
    Hm = p["w_fc1"].shape[1]
    qkv_bias = jnp.concatenate(
        [p["q_bias"], jnp.zeros_like(p["v_bias"]), p["v_bias"]])
    bias_hm = relpos_bias(p["table"].T, onehot_km)          # (H, N*N), lane-dense
    bias = bias_hm.reshape(num_heads, N, N)
    return dict(
        ln1_w=p["ln1_w"].reshape(1, C), ln1_b=p["ln1_b"].reshape(1, C),
        w_qkv=p["w_qkv"], qkv_b=qkv_bias.reshape(1, 3 * C),
        bias=bias,
        w_proj=p["w_proj"], b_proj=p["b_proj"].reshape(1, C),
        ln2_w=p["ln2_w"].reshape(1, C), ln2_b=p["ln2_b"].reshape(1, C),
        w_fc1=p["w_fc1"], b_fc1=p["b_fc1"].reshape(1, Hm),
        w_fc2=p["w_fc2"], b_fc2=p["b_fc2"].reshape(1, C),
    )


def block_forward(x, prep, scale, num_heads):
    """Single fused pallas_call for the whole Block forward."""
    B, N, C = x.shape
    Hm = prep["w_fc1"].shape[1]
    kern = functools.partial(_block_kernel, scale=scale, num_heads=num_heads)

    def full(shape):
        return pl.BlockSpec(shape, lambda b, _s=shape: (0,) * len(_s))

    return pl.pallas_call(
        kern,
        out_shape=jax.ShapeDtypeStruct((B, N, C), jnp.float32),
        grid=(B,),
        in_specs=[
            pl.BlockSpec((None, N, C), lambda b: (b, 0, 0)),   # x (per-batch block)
            full((1, C)), full((1, C)),                        # ln1 w, b
            full((C, 3 * C)), full((1, 3 * C)),                # qkv w, b
            full((num_heads, N, N)),                           # rel-pos bias
            full((C, C)), full((1, C)),                        # proj w, b
            full((1, C)), full((1, C)),                        # ln2 w, b
            full((C, Hm)), full((1, Hm)),                      # fc1 w, b
            full((Hm, C)), full((1, C)),                       # fc2 w, b
        ],
        out_specs=pl.BlockSpec((None, N, C), lambda b: (b, 0, 0)),
        compiler_params=pltpu.CompilerParams(dimension_semantics=("parallel",)),
    )(x, prep["ln1_w"], prep["ln1_b"], prep["w_qkv"], prep["qkv_b"], prep["bias"],
      prep["w_proj"], prep["b_proj"], prep["ln2_w"], prep["ln2_b"],
      prep["w_fc1"], prep["b_fc1"], prep["w_fc2"], prep["b_fc2"])


# ----------------------------------------------------------------------------
# Pure-JAX reference (same math, precision=HIGHEST)
# ----------------------------------------------------------------------------
def reference_block(x, p, rpi, scale, num_heads, eps=1e-5):
    hi = jax.lax.Precision.HIGHEST
    B, N, C = x.shape
    H = num_heads
    D = C // H

    def ln(z, w, b):
        mu = jnp.mean(z, axis=-1, keepdims=True)
        var = jnp.mean((z - mu) ** 2, axis=-1, keepdims=True)
        return (z - mu) * jax.lax.rsqrt(var + eps) * w + b

    h1 = ln(x, p["ln1_w"], p["ln1_b"])
    qkv_b = jnp.concatenate([p["q_bias"], jnp.zeros_like(p["v_bias"]), p["v_bias"]])
    qkv = jnp.einsum("bnc,co->bno", h1, p["w_qkv"], precision=hi) + qkv_b
    qkv = qkv.reshape(B, N, 3, H, D).transpose(2, 0, 3, 1, 4)
    q, k, v = qkv[0] * scale, qkv[1], qkv[2]
    attn = jnp.einsum("bhqd,bhkd->bhqk", q, k, precision=hi)
    bias = p["table"][rpi.reshape(-1)].reshape(N, N, H).transpose(2, 0, 1)
    attn = attn + bias[None]
    attn = jax.nn.softmax(attn, axis=-1)
    o = jnp.einsum("bhqk,bhkd->bhqd", attn, v, precision=hi)
    o = o.transpose(0, 2, 1, 3).reshape(B, N, C)
    o = jnp.einsum("bnc,co->bno", o, p["w_proj"], precision=hi) + p["b_proj"]
    x = x + o
    h2 = ln(x, p["ln2_w"], p["ln2_b"])
    hdn = jnp.einsum("bnc,ch->bnh", h2, p["w_fc1"], precision=hi) + p["b_fc1"]
    hdn = 0.5 * hdn * (1.0 + jnp.tanh(0.7978845608028654 * (hdn + 0.044715 * hdn ** 3)))
    out = jnp.einsum("bnh,hc->bnc", hdn, p["w_fc2"], precision=hi) + p["b_fc2"]
    return x + out


# ----------------------------------------------------------------------------
if __name__ == "__main__":
    window_size = (4, 4)
    num_heads = 8
    dim = 64
    head_dim = dim // num_heads
    mlp_hidden = dim * 4
    B = 2
    N = window_size[0] * window_size[1] + 1          # 17 (window + cls token)
    scale = head_dim ** (-0.5)

    rpi_np, K = _build_relative_position_index(window_size)
    onehot = jnp.asarray(_build_static_onehot(rpi_np, K))   # (K, N*N), static

    key = jax.random.PRNGKey(0)
    ks = jax.random.split(key, 16)

    def nrm(k, shape, s=0.05):
        return s * jax.random.normal(k, shape, dtype=jnp.float32)

    params = dict(
        ln1_w=1.0 + nrm(ks[0], (dim,)),
        ln1_b=nrm(ks[1], (dim,)),
        w_qkv=nrm(ks[2], (dim, 3 * dim)),
        q_bias=nrm(ks[3], (dim,)),
        v_bias=nrm(ks[4], (dim,)),
        table=nrm(ks[5], (K, num_heads), s=0.2),     # (num_relative_distance, H)
        w_proj=nrm(ks[6], (dim, dim)),
        b_proj=nrm(ks[7], (dim,)),
        ln2_w=1.0 + nrm(ks[8], (dim,)),
        ln2_b=nrm(ks[9], (dim,)),
        w_fc1=nrm(ks[10], (dim, mlp_hidden)),
        b_fc1=nrm(ks[11], (mlp_hidden,)),
        w_fc2=nrm(ks[12], (mlp_hidden, dim)),
        b_fc2=nrm(ks[13], (dim,)),
    )
    x = jax.random.normal(ks[14], (B, N, dim), dtype=jnp.float32)

    # One-time prep (bias gather, qkv-bias concat, reshapes) -- off the hot path.
    prep = jax.tree_util.tree_map(jax.block_until_ready,
                                  prepare_params(params, onehot, num_heads, N))

    out = block_forward(x, prep, scale, num_heads)
    out = jax.block_until_ready(out)

    ref = reference_block(x, params, jnp.asarray(rpi_np), scale, num_heads)
    ref = jax.block_until_ready(ref)

    assert out.shape == (B, N, dim)
    assert out.dtype == jnp.float32
    np.testing.assert_allclose(np.asarray(out), np.asarray(ref), rtol=2e-4, atol=2e-4)

    print("KERNEL_OK")
</pallas_src>

<mosaic_0001>
module attributes {stable_mosaic.version = 11 : i64} {
  func.func @_relpos_bias_kernel(%arg0: memref<8x52xf32, #tpu.memory_space<vmem>>, %arg1: memref<52x289xf32, #tpu.memory_space<vmem>>, %arg2: memref<8x289xf32, #tpu.memory_space<vmem>>) attributes {dimension_semantics = [], scalar_prefetch = 0 : i64, scratch_operands = 0 : i64, tpu.core_type = #tpu.core_type<tc>} {
    %c0 = arith.constant 0 : index
    %c0_0 = arith.constant 0 : index
    %0 = vector.load %arg0[%c0, %c0_0] : memref<8x52xf32, #tpu.memory_space<vmem>>, vector<8x52xf32>
    %c0_1 = arith.constant 0 : index
    %c0_2 = arith.constant 0 : index
    %1 = vector.load %arg1[%c0_1, %c0_2] : memref<52x289xf32, #tpu.memory_space<vmem>>, vector<52x289xf32>
    %cst = arith.constant dense<0.000000e+00> : vector<8x289xf32>
    %2 = tpu.matmul %0, %1, %cst {dimension_numbers = #tpu.dot_dimension_numbers<[1], [0], [0], [1], [0, 0, 1, 1], [], []>} : vector<8x52xf32>, vector<52x289xf32>, vector<8x289xf32> -> vector<8x289xf32>
    %c0_3 = arith.constant 0 : index
    %c0_4 = arith.constant 0 : index
    %3 = vector.load %arg2[%c0_3, %c0_4] : memref<8x289xf32, #tpu.memory_space<vmem>>, vector<8x289xf32>
    tpu.vector_store %arg2[%c0_3, %c0_4], %2 {strides = array<i32>} : memref<8x289xf32, #tpu.memory_space<vmem>>, vector<8x289xf32>,
    return
  }
}

</mosaic_0001>

<llo_original>
// kernel: tpu_custom_call.1
$region0: #{tpu_custom_call.1}
  #allocation0 [shape = 'u32[]', space=smem, size = 0x4, offset = 0x4, fixed_abs, tag = 'smem constant byte address 0x4 - core index']
  #allocation1 [shape = 'u32[144,128]{1,0:T(1,128)}', space=vmem, size = 0x12000, scoped, tag = 'internal scratch']
  %s0 = inlined_call_operand.hbm [shape: f32[8,52], index: 0, kind: input, shape index: {}]
  %s1 = inlined_call_operand.hbm [shape: f32[52,289], index: 1, kind: input, shape index: {}]
  %s2 = inlined_call_operand.hbm [shape: f32[8,289], index: 2, kind: output, shape index: {}]
  %s3 = sld [smem:[#allocation0]]
  $region26: #{tpu_custom_call.1} parent=0
    _
  %s5 = ssub.s32 1, %s3
  %s6 = scalar_select 0, %s5, %s3
  $region1: #{tpu_custom_call.1} parent=0
    #allocation2 [shape = 'u8[4096]{0}', space=vmem, size = 0x1000, scoped, tag = 'input window, operand 0, single buffered']
    #allocation3 [shape = 's32[1]{0}', space=sflag, size = 0x4, scoped, tag = 'scoped memory for tpu_custom_call.1']
    #allocation4 [shape = 's32[1]{0}', space=sflag, size = 0x4, scoped, tag = 'scoped memory for tpu_custom_call.1']
    #allocation5 [shape = 'u8[86016]{0}', space=vmem, size = 0x15000, scoped, tag = 'input window, operand 1, single buffered']
    #allocation6 [shape = 's32[1]{0}', space=sflag, size = 0x4, scoped, tag = 'scoped memory for tpu_custom_call.1']
    #allocation7 [shape = 'u8[12288]{0}', space=vmem, size = 0x3000, scoped, tag = 'output window, operand 0, single buffered']
    %7 = vsyncpa [#allocation3], 0
    %8 = vsyncpa [#allocation6], 0
    %9 = vsyncpa [#allocation4], 0
    // Predicated region
    $region2: #{tpu_custom_call.1} parent=1 // pred_check
      _
    $region3: #{tpu_custom_call.1} parent=1 // pred_check_branch
      %11 = sbr.rel (0) target = $region5
    $region4: #{tpu_custom_call.1} parent=1 // pred_region
      %s13 = ssub.s32 128, 128
      %14 = vsyncadd [#allocation3], %s13
      %s16 = sshll.u32 [#allocation2], 4
      %s17 = int_to_ptr.vmem [resolvable:$true] %s16
      %19 = dma.hbm_to_vmem [thread:$0]  %s0, 128, %s17, [#allocation3]
    $region5: #{tpu_custom_call.1} parent=1 // pred_fallthru
      _
    // Predicated region
    $region6: #{tpu_custom_call.1} parent=1 // pred_check
      _
    $region7: #{tpu_custom_call.1} parent=1 // pred_check_branch
      %21 = sbr.rel (0) target = $region9
    $region8: #{tpu_custom_call.1} parent=1 // pred_region
      %s23 = ssub.s32 2688, 2688
      %24 = vsyncadd [#allocation6], %s23
      %s25 = sshll.u32 [#allocation5], 4
      %s26 = int_to_ptr.vmem [resolvable:$true] %s25
      %31 = dma.hbm_to_vmem [thread:$0]  %s1, 2688, %s26, [#allocation6], 384, 384, 24
    $region9: #{tpu_custom_call.1} parent=1 // pred_fallthru
      _
    // Predicated region
    $region10: #{tpu_custom_call.1} parent=1 // pred_check
      _
    $region11: #{tpu_custom_call.1} parent=1 // pred_check_branch
      %33 = sbr.rel (0) target = $region13
    $region12: #{tpu_custom_call.1} parent=1 // pred_region
      %34 = dma.done [#allocation3], 128
    $region13: #{tpu_custom_call.1} parent=1 // pred_fallthru
      _
    // Predicated region
    $region14: #{tpu_custom_call.1} parent=1 // pred_check
      _
    $region15: #{tpu_custom_call.1} parent=1 // pred_check_branch
      %36 = sbr.rel (0) target = $region17
    $region16: #{tpu_custom_call.1} parent=1 // pred_region
      %37 = dma.done [#allocation6], 2688
    $region17: #{tpu_custom_call.1} parent=1 // pred_fallthru
      _
    %v38 = vld [vmem:[#allocation2] sm:$0xff]
    %v39 = vld [vmem:[#allocation5] sm:$0xff]
    %v40 = vld [vmem:[#allocation5 + $0x8] sm:$0xff]
    %v41 = vld [vmem:[#allocation5 + $0x10] sm:$0xff]
    %v42 = vld [vmem:[#allocation5 + $0x18] sm:$0xff]
    %v43 = vld [vmem:[#allocation5 + $0x20] sm:$0xff]
    %v44 = vld [vmem:[#allocation5 + $0x28] sm:$0xff]
    %v45 = vld [vmem:[#allocation5 + $0x30] sm:$0xff]
    %v46 = vld [vmem:[#allocation5 + $0x38] sm:$0xff]
    %v47 = vld [vmem:[#allocation5 + $0x40] sm:$0xff]
    %v48 = vld [vmem:[#allocation5 + $0x48] sm:$0xff]
    %v49 = vld [vmem:[#allocation5 + $0x50] sm:$0xff]
    %v50 = vld [vmem:[#allocation5 + $0x58] sm:$0xff]
    %v51 = vld [vmem:[#allocation5 + $0x60] sm:$0xff]
    %v52 = vld [vmem:[#allocation5 + $0x68] sm:$0xff]
    %v53 = vld [vmem:[#allocation5 + $0x70] sm:$0xff]
    %v54 = vld [vmem:[#allocation5 + $0x78] sm:$0xff]
    %v55 = vld [vmem:[#allocation5 + $0x80] sm:$0xff]
    %v56 = vld [vmem:[#allocation5 + $0x88] sm:$0xff]
    %v57 = vld [vmem:[#allocation5 + $0x90] sm:$0xf]
    %v58 = vld [vmem:[#allocation5 + $0x98] sm:$0xf]
    %v59 = vld [vmem:[#allocation5 + $0xa0] sm:$0xf]
    %vm60 = vcmask 424960
    %v62 = vsel %vm60, %v38, 0
    %vm64 = vcmask 1043456
    %v66 = vsel %vm64, %v57, 0
    %v69 = vsel %vm64, %v58, 0
    %v72 = vsel %vm64, %v59, 0
    %74 = vmatprep.subr.mxu0 %v40
    %75 = vmatpush1.msra.mxu0 %v39
    %76 = vmatprep.subr.mxu0 %v43
    %77 = vmatpush1.msra.mxu0 %v42
    %78 = vmatprep.subr.mxu0 %v46
    %79 = vmatpush1.msra.mxu0 %v45
    %80 = vmatprep.subr.mxu0 %v49
    %81 = vmatpush1.msra.mxu0 %v48
    %82 = vmatprep.subr.mxu0 %v52
    %83 = vmatpush1.msra.mxu0 %v51
    %84 = vmatprep.subr.mxu0 %v55
    %85 = vmatpush1.msra.mxu0 %v54
    %86 = vmatprep.subr.mxu0 %v69
    %87 = vmatpush1.msra.mxu0 %v66
    %88 = vmatprep.subr.mxu0 0.0
    %89 = vmatpush1.msra.mxu0 0.0
    %90 = vmatprep.subr.mxu0 0.0
    %91 = vmatpush1.msra.mxu0 0.0
    %92 = vmatprep.subr.mxu0 0.0
    %93 = vmatpush1.msra.mxu0 0.0
    %94 = vmatprep.subr.mxu0 0.0
    %95 = vmatpush1.msra.mxu0 0.0
    %96 = vmatprep.subr.mxu0 0.0
    %97 = vmatpush1.msra.mxu0 0.0
    %98 = vmatprep.subr.mxu0 0.0
    %99 = vmatpush1.msra.mxu0 0.0
    %100 = vmatprep.subr.mxu0 0.0
    %101 = vmatpush1.msra.mxu0 0.0
    %102 = vmatprep.subr.mxu0 0.0
    %103 = vmatpush1.msra.mxu0 0.0
    %104 = vmatprep.subr.mxu0 0.0
    %105 = vmatpush1.msra.mxu0 0.0
    %106 = vmatprep.subr.mxu0 0.0
    %107 = vmatpush1.msra.mxu0 0.0
    %108 = vmatprep.subr.mxu0 0.0
    %109 = vmatpush1.msra.mxu0 0.0
    %110 = vmatprep.subr.mxu0 0.0
    %111 = vmatpush1.msra.mxu0 0.0
    %112 = vmatprep.subr.mxu0 0.0
    %113 = vmatpush1.msra.mxu0 0.0
    %114 = vmatprep.subr.mxu0 0.0
    %115 = vmatpush1.msra.mxu0 0.0
    %116 = vmatprep.subr.mxu0 0.0
    %117 = vmatpush1.msra.mxu0 0.0
    %118 = vmatprep.subr.mxu0 0.0
    %119 = vmatpush1.msra.mxu0 0.0
    %120 = vmatprep.subr.mxu0 0.0
    %121 = vmatpush1.msra.mxu0 0.0
    %122 = vmatprep.subr.mxu0 0.0
    %123 = vmatpush1.msra.mxu0 0.0
    %124 = vmatprep.subr.mxu0 0.0
    %125 = vmatpush1.msra.mxu0 0.0
    %126 = vmatprep.subr.mxu0 0.0
    %127 = vmatpush1.msra.mxu0 0.0
    %128 = vmatprep.subr.mxu0 0.0
    %129 = vmatpush1.msra.mxu0 0.0
    %130 = vmatprep.subr.mxu0 0.0
    %131 = vmatpush1.msra.mxu0 0.0
    %132 = vmatprep.subr.mxu0 0.0
    %133 = vmatpush1.msra.mxu0 0.0
    %134 = vmatprep.subr.mxu0 0.0
    %135 = vmatpush1.msra.mxu0 0.0
    %136 = vmatprep.subr.mxu0 0.0
    %137 = vmatpush1.msra.mxu0 0.0
    %138 = vmatprep.mubr.f32.mxu0 0.0
    %139 = vmatmul.mubr.f32.gmra.mrb[0].mxu0 %v62
    %v140 = vpop.f32.mrb[0].mxu0
    %v141 = vadd.f32 0.0, %v140
    %v142 = vpop.f32.mrb[0].mxu0
    %v143 = vadd.f32 0.0, %v142
    %144 = vdwg.mxu0
    %145 = vmatprep.subr.mxu0 0.0
    %146 = vmatpush1.msra.mxu0 %v41
    %147 = vmatprep.subr.mxu0 0.0
    %148 = vmatpush1.msra.mxu0 %v44
    %149 = vmatprep.subr.mxu0 0.0
    %150 = vmatpush1.msra.mxu0 %v47
    %151 = vmatprep.subr.mxu0 0.0
    %152 = vmatpush1.msra.mxu0 %v50
    %153 = vmatprep.subr.mxu0 0.0
    %154 = vmatpush1.msra.mxu0 %v53
    %155 = vmatprep.subr.mxu0 0.0
    %156 = vmatpush1.msra.mxu0 %v56
    %157 = vmatprep.subr.mxu0 0.0
    %158 = vmatpush1.msra.mxu0 %v72
    %159 = vmatprep.subr.mxu0 0.0
    %160 = vmatpush1.msra.mxu0 0.0
    %161 = vmatprep.subr.mxu0 0.0
    %162 = vmatpush1.msra.mxu0 0.0
    %163 = vmatprep.subr.mxu0 0.0
    %164 = vmatpush1.msra.mxu0 0.0
    %165 = vmatprep.subr.mxu0 0.0
    %166 = vmatpush1.msra.mxu0 0.0
    %167 = vmatprep.subr.mxu0 0.0
    %168 = vmatpush1.msra.mxu0 0.0
    %169 = vmatprep.subr.mxu0 0.0
    %170 = vmatpush1.msra.mxu0 0.0
    %171 = vmatprep.subr.mxu0 0.0
    %172 = vmatpush1.msra.mxu0 0.0
    %173 = vmatprep.subr.mxu0 0.0
    %174 = vmatpush1.msra.mxu0 0.0
    %175 = vmatprep.subr.mxu0 0.0
    %176 = vmatpush1.msra.mxu0 0.0
    %177 = vmatprep.subr.mxu0 0.0
    %178 = vmatpush1.msra.mxu0 0.0
    %179 = vmatprep.subr.mxu0 0.0
    %180 = vmatpush1.msra.mxu0 0.0
    %181 = vmatprep.subr.mxu0 0.0
    %182 = vmatpush1.msra.mxu0 0.0
    %183 = vmatprep.subr.mxu0 0.0
    %184 = vmatpush1.msra.mxu0 0.0
    %185 = vmatprep.subr.mxu0 0.0
    %186 = vmatpush1.msra.mxu0 0.0
    %187 = vmatprep.subr.mxu0 0.0
    %188 = vmatpush1.msra.mxu0 0.0
    %189 = vmatprep.subr.mxu0 0.0
    %190 = vmatpush1.msra.mxu0 0.0
    %191 = vmatprep.subr.mxu0 0.0
    %192 = vmatpush1.msra.mxu0 0.0
    %193 = vmatprep.subr.mxu0 0.0
    %194 = vmatpush1.msra.mxu0 0.0
    %195 = vmatprep.subr.mxu0 0.0
    %196 = vmatpush1.msra.mxu0 0.0
    %197 = vmatprep.subr.mxu0 0.0
    %198 = vmatpush1.msra.mxu0 0.0
    %199 = vmatprep.subr.mxu0 0.0
    %200 = vmatpush1.msra.mxu0 0.0
    %201 = vmatprep.subr.mxu0 0.0
    %202 = vmatpush1.msra.mxu0 0.0
    %203 = vmatprep.subr.mxu0 0.0
    %204 = vmatpush1.msra.mxu0 0.0
    %205 = vmatprep.subr.mxu0 0.0
    %206 = vmatpush1.msra.mxu0 0.0
    %207 = vmatprep.subr.mxu0 0.0
    %208 = vmatpush1.msra.mxu0 0.0
    %209 = vmatprep.mubr.f32.mxu0 0.0
    %210 = vmatmul.mubr.f32.gmra.mrb[0].mxu0 %v62
    %v211 = vpop.f32.mrb[0].mxu0
    %v212 = vadd.f32 0.0, %v211
    %v213 = vpop.f32.mrb[0].mxu0
    %214 = vdwg.mxu0
    %215 = vst [vmem:[#allocation7] sm:$0xff] %v141
    %216 = vst [vmem:[#allocation7 + $0x8] sm:$0xff] %v143
    %vm217 = vcmask 269312
    %218 = vst.msk [vmem:[#allocation7 + $0x10] sm:$0xff] %vm217, %v212
    // Predicated region
    $region18: #{tpu_custom_call.1} parent=1 // pred_check
      _
    $region19: #{tpu_custom_call.1} parent=1 // pred_check_branch
      %220 = sbr.rel (0) target = $region21
    $region20: #{tpu_custom_call.1} parent=1 // pred_region
      %s222 = ssub.s32 384, 384
      %223 = vsyncadd [#allocation4], %s222
      %s225 = sshll.u32 [#allocation7], 4
      %s226 = int_to_ptr.vmem [resolvable:$true] %s225
      %228 = dma.vmem_to_hbm [thread:$0]  %s226, 384, %s2, [#allocation4]
    $region21: #{tpu_custom_call.1} parent=1 // pred_fallthru
      _
    // Predicated region
    $region22: #{tpu_custom_call.1} parent=1 // pred_check
      _
    $region23: #{tpu_custom_call.1} parent=1 // pred_check_branch
      %230 = sbr.rel (0) target = $region25
    $region24: #{tpu_custom_call.1} parent=1 // pred_region
      %231 = dma.done [#allocation4], 384
    $region25: #{tpu_custom_call.1} parent=1 // pred_fallthru
      _
    %232 = vsyncpa [#allocation3], 1
    %233 = vsyncpa [#allocation6], 1
    %234 = vsyncpa [#allocation4], 1

</llo_original>
